<compile_context>
chip_gen: v6e
topology: v6e:2x2x1
jax: 0.10.0
libtpu: 0.0.40
codegen_flags: <defaults>
</compile_context>

<pallas_src>
import jax
import jax.numpy as jnp
from jax.experimental import pallas as pl
from jax.experimental.pallas import tpu as pltpu

INPUT_DIM = 64                    # L (even, >= 8)
HIDDEN = 32
K1, K2 = 3, 7


def _round_up(n, m):
    return ((n + m - 1) // m) * m


def critic_kernel(x_ref, a2t_ref, c2_ref, w1t_ref, b1_ref, w2t_ref, b2_ref,
                  w3t_ref, b3_ref, out_ref):
    wdt = a2t_ref.dtype
    phase = c2_ref.shape[0] // 2                     # padded per-phase width

    # Batch on the lane axis: (tb, L) -> (L, tb). Transpose in f32 (XLU),
    # then cast matmul operands to the weight dtype (bf16 -> f32 accumulate).
    x_t = x_ref[...].T.astype(wdt)                   # (L, tb)

    # Fused conv1 -> conv2, both max-pool phases stacked on sublanes.
    y = jnp.dot(a2t_ref[...], x_t,
                preferred_element_type=jnp.float32) + c2_ref[...]   # (2*phase, tb)
    pool = jnp.maximum(y[:phase, :], y[phase:, :])                   # (phase, tb)

    # fc1 -> ReLU -> fc2 -> ReLU -> fc3, all with batch on lanes.
    h1 = jnp.maximum(
        jnp.dot(w1t_ref[...], pool.astype(wdt),
                preferred_element_type=jnp.float32) + b1_ref[...], 0.0)
    h2 = jnp.maximum(
        jnp.dot(w2t_ref[...], h1.astype(wdt),
                preferred_element_type=jnp.float32) + b2_ref[...], 0.0)
    out_ref[...] = (jnp.dot(w3t_ref[...], h2.astype(wdt),
                            preferred_element_type=jnp.float32)
                    + b3_ref[...])                                   # (1, tb)


def prepare_params(p, input_dim=INPUT_DIM, weight_dtype=jnp.bfloat16):
    """Fold conv1+conv2 (both affine in x) into one phase-stacked matrix.

    Re-run after every raw parameter update; the kernel consumes these fused
    tensors, not the raw conv weights.
    """
    L = input_dim
    lc = L - 4
    m = lc // 2
    phase = _round_up(m, 8)                          # sublane-aligned phase width
    hidden = p["W1"].shape[1]

    def conv_chain(x):                               # (L,) -> (lc,)
        xp = jnp.pad(x, (1, 1))
        y1 = sum(p["w1c"][k] * xp[k:k + L] for k in range(K1)) + p["b1c"][0]
        y1p = jnp.pad(y1, (1, 1))
        return sum(p["w2c"][k] * y1p[k:k + lc] for k in range(K2)) + p["b2c"][0]

    zero = jnp.zeros((L,), jnp.float32)
    c = conv_chain(zero)                             # (lc,) edge-aware bias
    J = jax.jacfwd(conv_chain)(zero)                 # (lc, L) fused conv matrix

    # Stack even/odd pool phases along sublanes, zero-padded to `phase` each.
    a2t = jnp.zeros((2 * phase, L), jnp.float32)
    a2t = a2t.at[:m].set(J[0::2]).at[phase:phase + m].set(J[1::2])
    c2 = jnp.zeros((2 * phase, 1), jnp.float32)
    c2 = c2.at[:m, 0].set(c[0::2]).at[phase:phase + m, 0].set(c[1::2])

    # fc1 weight, transposed and zero-padded on the contraction axis so the
    # (padded) pool rows m..phase-1 contribute nothing.
    w1t = jnp.zeros((hidden, phase), jnp.float32).at[:, :m].set(p["W1"].T)

    return dict(
        A2T=a2t.astype(weight_dtype),
        c2=c2,
        W1T=w1t.astype(weight_dtype),          b1=p["bf1"].reshape(hidden, 1),
        W2T=p["W2"].T.astype(weight_dtype),    b2=p["bf2"].reshape(hidden, 1),
        W3T=p["W3"].T.astype(weight_dtype),    b3=p["bf3"].reshape(1, 1),
    )


def critic_forward(x, fp, *, batch_tile=1024):
    """x: (B, L) -> (B, 1); row b equals Critic.forward(x[b])."""
    B, L = x.shape
    n2, L2 = fp["A2T"].shape
    assert L2 == L, (L2, L)
    hidden = fp["W2T"].shape[0]

    # Tile choice: VMEM is never the constraint (even tb=8192 is ~2 MiB of x
    # plus ~25 KiB of weights), so pick the tile purely for per-step overhead.
    # Keep tb a multiple of 128 so multi-step grids have lane-dense (1, tb)
    # output blocks; B > batch_tile naturally yields >=2 "parallel" steps for
    # v7x's two TensorCores.
    if B <= batch_tile:
        tb = _round_up(max(B, 8), 128)
    else:
        tb = _round_up(batch_tile, 128)
    Bp = _round_up(B, tb)                            # pad ragged batches
    xp = x if Bp == B else jnp.pad(x, ((0, Bp - B), (0, 0)))

    rep = lambda i: (0, 0)                           # grid-invariant weights

    wbytes = sum(int(v.size) * v.dtype.itemsize for v in fp.values())
    cost = pl.CostEstimate(
        flops=2 * Bp * (n2 * L + hidden * (n2 // 2) + hidden * hidden + hidden),
        transcendentals=0,
        bytes_accessed=int(xp.size) * xp.dtype.itemsize + Bp * 4 + wbytes)

    out_t = pl.pallas_call(
        critic_kernel,
        out_shape=jax.ShapeDtypeStruct((1, Bp), jnp.float32),
        grid=(Bp // tb,),
        in_specs=[
            pl.BlockSpec((tb, L), lambda i: (i, 0)),           # x batch tile
            pl.BlockSpec((n2, L), rep),                        # A2T
            pl.BlockSpec((n2, 1), rep),                        # c2
            pl.BlockSpec((hidden, n2 // 2), rep),              # W1T
            pl.BlockSpec((hidden, 1), rep),                    # b1
            pl.BlockSpec((hidden, hidden), rep),               # W2T
            pl.BlockSpec((hidden, 1), rep),                    # b2
            pl.BlockSpec((1, hidden), rep),                    # W3T
            pl.BlockSpec((1, 1), rep),                         # b3
        ],
        out_specs=pl.BlockSpec((1, tb), lambda i: (0, i)),     # lane-dense out
        compiler_params=pltpu.CompilerParams(
            dimension_semantics=("parallel",)),                # v7x 2-TC shard
        cost_estimate=cost,
    )(xp, fp["A2T"], fp["c2"], fp["W1T"], fp["b1"],
      fp["W2T"], fp["b2"], fp["W3T"], fp["b3"])

    return out_t[0, :B][:, None]                               # (B, 1)


def init_params(key, input_dim=INPUT_DIM, hidden=HIDDEN):
    """Deterministic PyTorch-default-style uniform(-1/sqrt(fan_in), +) init."""
    ks = jax.random.split(key, 10)
    m = input_dim // 2 - 2

    def unif(k, shape, fan_in):
        bound = 1.0 / (fan_in ** 0.5)
        return jax.random.uniform(k, shape, jnp.float32, -bound, bound)

    return dict(
        w1c=unif(ks[0], (K1,), K1), b1c=unif(ks[1], (1,), K1),
        w2c=unif(ks[2], (K2,), K2), b2c=unif(ks[3], (1,), K2),
        W1=unif(ks[4], (m, hidden), m),           bf1=unif(ks[5], (1, hidden), m),
        W2=unif(ks[6], (hidden, hidden), hidden), bf2=unif(ks[7], (1, hidden), hidden),
        W3=unif(ks[8], (hidden, 1), hidden),      bf3=unif(ks[9], (1, 1), hidden),
    )


def reference_forward(x, p):
    """Pure-JAX reference (single state), standard conv / pool formulation."""
    L = x.shape[0]
    xp = jnp.pad(x, (1, 1))
    y1 = sum(p["w1c"][k] * xp[k:k + L] for k in range(K1)) + p["b1c"][0]
    y1p = jnp.pad(y1, (1, 1))
    lc = L - 4
    y2 = sum(p["w2c"][k] * y1p[k:k + lc] for k in range(K2)) + p["b2c"][0]
    pool = y2.reshape(lc // 2, 2).max(axis=1)
    h1 = jax.nn.relu(pool[None, :] @ p["W1"] + p["bf1"])
    h2 = jax.nn.relu(h1 @ p["W2"] + p["bf2"])
    return h2 @ p["W3"] + p["bf3"]


if __name__ == "__main__":
    key = jax.random.PRNGKey(0)
    pkey, xkey = jax.random.split(key)
    params = init_params(pkey)

    B = 512
    x = jax.random.normal(xkey, (B, INPUT_DIM), jnp.float32)
    ref = jax.vmap(lambda xi: reference_forward(xi, params)[0, 0])(x)[:, None]

    fwd = jax.jit(critic_forward)

    # 1) f32 fused weights: tight semantics check.
    fused_f32 = prepare_params(params, weight_dtype=jnp.float32)
    v_f32 = jax.block_until_ready(fwd(x, fused_f32))
    assert v_f32.shape == (B, 1), v_f32.shape
    assert jnp.allclose(v_f32, ref, atol=5e-4, rtol=5e-4), (
        float(jnp.max(jnp.abs(v_f32 - ref))))

    # 2) bf16 fused weights (perf default on v5e/v6e/v7x): loosened tolerance.
    fused_bf16 = prepare_params(params)
    v_bf16 = jax.block_until_ready(fwd(x, fused_bf16))
    assert jnp.allclose(v_bf16, ref, atol=5e-2, rtol=5e-2), (
        float(jnp.max(jnp.abs(v_bf16 - ref))))

    # 3) Ragged batch (exercises the pad-to-tile path).
    v_rag = jax.block_until_ready(fwd(x[:37], fused_f32))
    assert v_rag.shape == (37, 1), v_rag.shape
    assert jnp.allclose(v_rag, ref[:37], atol=5e-4, rtol=5e-4), (
        float(jnp.max(jnp.abs(v_rag - ref[:37]))))

    print("KERNEL_OK")
</pallas_src>

<mosaic_0001>
module attributes {stable_mosaic.version = 11 : i64} {
  func.func @critic_kernel(%arg0: i32, %arg1: memref<512x64xf32, #tpu.memory_space<vmem>>, %arg2: memref<64x64xf32, #tpu.memory_space<vmem>>, %arg3: memref<64x1xf32, #tpu.memory_space<vmem>>, %arg4: memref<32x32xf32, #tpu.memory_space<vmem>>, %arg5: memref<32x1xf32, #tpu.memory_space<vmem>>, %arg6: memref<32x32xf32, #tpu.memory_space<vmem>>, %arg7: memref<32x1xf32, #tpu.memory_space<vmem>>, %arg8: memref<1x32xf32, #tpu.memory_space<vmem>>, %arg9: memref<1x1xf32, #tpu.memory_space<vmem>>, %arg10: memref<1x512xf32, #tpu.memory_space<vmem>>) attributes {dimension_semantics = [#tpu.dimension_semantics<parallel>], iteration_bounds = array<i64: 1>, scalar_prefetch = 0 : i64, scratch_operands = 0 : i64, tpu.core_type = #tpu.core_type<tc>, window_params = [{transform_indices = @transform_0, window_bounds = array<i64: 512, 64>}, {pipeline_mode = #tpu.pipeline_mode<synchronous>, transform_indices = @transform_1, window_bounds = array<i64: 64, 64>}, {pipeline_mode = #tpu.pipeline_mode<synchronous>, transform_indices = @transform_2, window_bounds = array<i64: 64, 1>}, {pipeline_mode = #tpu.pipeline_mode<synchronous>, transform_indices = @transform_3, window_bounds = array<i64: 32, 32>}, {pipeline_mode = #tpu.pipeline_mode<synchronous>, transform_indices = @transform_4, window_bounds = array<i64: 32, 1>}, {pipeline_mode = #tpu.pipeline_mode<synchronous>, transform_indices = @transform_5, window_bounds = array<i64: 32, 32>}, {pipeline_mode = #tpu.pipeline_mode<synchronous>, transform_indices = @transform_6, window_bounds = array<i64: 32, 1>}, {pipeline_mode = #tpu.pipeline_mode<synchronous>, transform_indices = @transform_7, window_bounds = array<i64: 1, 32>}, {pipeline_mode = #tpu.pipeline_mode<synchronous>, transform_indices = @transform_8, window_bounds = array<i64: 1, 1>}, {transform_indices = @transform_9, window_bounds = array<i64: 1, 512>}]} {
    %c0 = arith.constant 0 : index
    %c0_0 = arith.constant 0 : index
    %0 = vector.load %arg1[%c0, %c0_0] : memref<512x64xf32, #tpu.memory_space<vmem>>, vector<512x64xf32>
    %1 = tpu.transpose %0, [1, 0] : vector<512x64xf32> -> vector<64x512xf32>
    %c0_1 = arith.constant 0 : index
    %c0_2 = arith.constant 0 : index
    %2 = vector.load %arg2[%c0_1, %c0_2] : memref<64x64xf32, #tpu.memory_space<vmem>>, vector<64x64xf32>
    %cst = arith.constant dense<0.000000e+00> : vector<64x512xf32>
    %3 = tpu.matmul %2, %1, %cst {dimension_numbers = #tpu.dot_dimension_numbers<[1], [0], [0], [1], [0, 0, 1, 1], [], []>} : vector<64x64xf32>, vector<64x512xf32>, vector<64x512xf32> -> vector<64x512xf32>
    %c0_3 = arith.constant 0 : index
    %c0_4 = arith.constant 0 : index
    %4 = vector.load %arg3[%c0_3, %c0_4] : memref<64x1xf32, #tpu.memory_space<vmem>>, vector<64x1xf32>
    %5 = vector.broadcast %4 : vector<64x1xf32> to vector<64x512xf32>
    %6 = arith.addf %3, %5 : vector<64x512xf32>
    %7 = vector.extract_strided_slice %6 {offsets = [0, 0], sizes = [32, 512], strides = [1, 1]} : vector<64x512xf32> to vector<32x512xf32>
    %8 = vector.extract_strided_slice %6 {offsets = [32, 0], sizes = [32, 512], strides = [1, 1]} : vector<64x512xf32> to vector<32x512xf32>
    %9 = arith.maximumf %7, %8 : vector<32x512xf32>
    %c0_5 = arith.constant 0 : index
    %c0_6 = arith.constant 0 : index
    %10 = vector.load %arg4[%c0_5, %c0_6] : memref<32x32xf32, #tpu.memory_space<vmem>>, vector<32x32xf32>
    %cst_7 = arith.constant dense<0.000000e+00> : vector<32x512xf32>
    %11 = tpu.matmul %10, %9, %cst_7 {dimension_numbers = #tpu.dot_dimension_numbers<[1], [0], [0], [1], [0, 0, 1, 1], [], []>} : vector<32x32xf32>, vector<32x512xf32>, vector<32x512xf32> -> vector<32x512xf32>
    %c0_8 = arith.constant 0 : index
    %c0_9 = arith.constant 0 : index
    %12 = vector.load %arg5[%c0_8, %c0_9] : memref<32x1xf32, #tpu.memory_space<vmem>>, vector<32x1xf32>
    %13 = vector.broadcast %12 : vector<32x1xf32> to vector<32x512xf32>
    %14 = arith.addf %11, %13 : vector<32x512xf32>
    %cst_10 = arith.constant 0.000000e+00 : f32
    %15 = vector.broadcast %cst_10 : f32 to vector<32x512xf32>
    %16 = arith.maximumf %14, %15 : vector<32x512xf32>
    %c0_11 = arith.constant 0 : index
    %c0_12 = arith.constant 0 : index
    %17 = vector.load %arg6[%c0_11, %c0_12] : memref<32x32xf32, #tpu.memory_space<vmem>>, vector<32x32xf32>
    %cst_13 = arith.constant dense<0.000000e+00> : vector<32x512xf32>
    %18 = tpu.matmul %17, %16, %cst_13 {dimension_numbers = #tpu.dot_dimension_numbers<[1], [0], [0], [1], [0, 0, 1, 1], [], []>} : vector<32x32xf32>, vector<32x512xf32>, vector<32x512xf32> -> vector<32x512xf32>
    %c0_14 = arith.constant 0 : index
    %c0_15 = arith.constant 0 : index
    %19 = vector.load %arg7[%c0_14, %c0_15] : memref<32x1xf32, #tpu.memory_space<vmem>>, vector<32x1xf32>
    %20 = vector.broadcast %19 : vector<32x1xf32> to vector<32x512xf32>
    %21 = arith.addf %18, %20 : vector<32x512xf32>
    %cst_16 = arith.constant 0.000000e+00 : f32
    %22 = vector.broadcast %cst_16 : f32 to vector<32x512xf32>
    %23 = arith.maximumf %21, %22 : vector<32x512xf32>
    %c0_17 = arith.constant 0 : index
    %c0_18 = arith.constant 0 : index
    %24 = vector.load %arg8[%c0_17, %c0_18] : memref<1x32xf32, #tpu.memory_space<vmem>>, vector<1x32xf32>
    %cst_19 = arith.constant dense<0.000000e+00> : vector<1x512xf32>
    %25 = tpu.matmul %24, %23, %cst_19 {dimension_numbers = #tpu.dot_dimension_numbers<[1], [0], [0], [1], [0, 0, 1, 1], [], []>} : vector<1x32xf32>, vector<32x512xf32>, vector<1x512xf32> -> vector<1x512xf32>
    %c0_20 = arith.constant 0 : index
    %c0_21 = arith.constant 0 : index
    %26 = vector.load %arg9[%c0_20, %c0_21] : memref<1x1xf32, #tpu.memory_space<vmem>>, vector<1x1xf32>
    %27 = vector.broadcast %26 : vector<1x1xf32> to vector<1x512xf32>
    %28 = arith.addf %25, %27 : vector<1x512xf32>
    %c0_22 = arith.constant 0 : index
    %c0_23 = arith.constant 0 : index
    %29 = vector.load %arg10[%c0_22, %c0_23] : memref<1x512xf32, #tpu.memory_space<vmem>>, vector<1x512xf32>
    tpu.vector_store %arg10[%c0_22, %c0_23], %28 {strides = array<i32>} : memref<1x512xf32, #tpu.memory_space<vmem>>, vector<1x512xf32>,
    return
  }
  func.func @transform_0(%arg0: i32) -> (i32, i32) {
    %c0_i32 = arith.constant 0 : i32
    %c0_i32_0 = arith.constant 0 : i32
    return %arg0, %c0_i32 : i32, i32
  }
  func.func @transform_1(%arg0: i32) -> (i32, i32) {
    %c0_i32 = arith.constant 0 : i32
    %c0_i32_0 = arith.constant 0 : i32
    %c0_i32_1 = arith.constant 0 : i32
    return %c0_i32, %c0_i32_0 : i32, i32
  }
  func.func @transform_2(%arg0: i32) -> (i32, i32) {
    %c0_i32 = arith.constant 0 : i32
    %c0_i32_0 = arith.constant 0 : i32
    %c0_i32_1 = arith.constant 0 : i32
    return %c0_i32, %c0_i32_0 : i32, i32
  }
  func.func @transform_3(%arg0: i32) -> (i32, i32) {
    %c0_i32 = arith.constant 0 : i32
    %c0_i32_0 = arith.constant 0 : i32
    %c0_i32_1 = arith.constant 0 : i32
    return %c0_i32, %c0_i32_0 : i32, i32
  }
  func.func @transform_4(%arg0: i32) -> (i32, i32) {
    %c0_i32 = arith.constant 0 : i32
    %c0_i32_0 = arith.constant 0 : i32
    %c0_i32_1 = arith.constant 0 : i32
    return %c0_i32, %c0_i32_0 : i32, i32
  }
  func.func @transform_5(%arg0: i32) -> (i32, i32) {
    %c0_i32 = arith.constant 0 : i32
    %c0_i32_0 = arith.constant 0 : i32
    %c0_i32_1 = arith.constant 0 : i32
    return %c0_i32, %c0_i32_0 : i32, i32
  }
  func.func @transform_6(%arg0: i32) -> (i32, i32) {
    %c0_i32 = arith.constant 0 : i32
    %c0_i32_0 = arith.constant 0 : i32
    %c0_i32_1 = arith.constant 0 : i32
    return %c0_i32, %c0_i32_0 : i32, i32
  }
  func.func @transform_7(%arg0: i32) -> (i32, i32) {
    %c0_i32 = arith.constant 0 : i32
    %c0_i32_0 = arith.constant 0 : i32
    %c0_i32_1 = arith.constant 0 : i32
    return %c0_i32, %c0_i32_0 : i32, i32
  }
  func.func @transform_8(%arg0: i32) -> (i32, i32) {
    %c0_i32 = arith.constant 0 : i32
    %c0_i32_0 = arith.constant 0 : i32
    %c0_i32_1 = arith.constant 0 : i32
    return %c0_i32, %c0_i32_0 : i32, i32
  }
  func.func @transform_9(%arg0: i32) -> (i32, i32) {
    %c0_i32 = arith.constant 0 : i32
    %c0_i32_0 = arith.constant 0 : i32
    return %c0_i32, %arg0 : i32, i32
  }
}

</mosaic_0001>

<llo_original>
// kernel: critic_forward.1
$region0: #{critic_forward.1}
  #allocation0 [shape = 'u32[]', space=smem, size = 0x4, offset = 0x4, fixed_abs, tag = 'smem constant byte address 0x4 - core index']
  #allocation1 [shape = 'u32[144,128]{1,0:T(1,128)}', space=vmem, size = 0x12000, scoped, tag = 'internal scratch']
  #allocation2 [shape = 'f32[1,1]{1,0:T(1,128)S(1)}', space=vmem, size = 0x200, scoped, tag = 'scoped memory for critic_forward.1']
  %s0 = inlined_call_operand.vmem [shape: f32[512,64], index: 0, kind: input, shape index: {}]
  %s1 = inlined_call_operand.vmem [shape: f32[64,64], index: 1, kind: input, shape index: {}]
  %s2 = inlined_call_operand.vmem [shape: f32[64,1], index: 2, kind: input, shape index: {}]
  %s3 = inlined_call_operand.vmem [shape: f32[32,32], index: 3, kind: input, shape index: {}]
  %s4 = inlined_call_operand.vmem [shape: f32[32,1], index: 4, kind: input, shape index: {}]
  %s5 = inlined_call_operand.vmem [shape: f32[32,32], index: 5, kind: input, shape index: {}]
  %s6 = inlined_call_operand.vmem [shape: f32[32,1], index: 6, kind: input, shape index: {}]
  %s7 = inlined_call_operand.vmem [shape: f32[1,32], index: 7, kind: input, shape index: {}]
  %s8 = inlined_call_operand.<no memory space> [shape: f32[1,1], index: 8, kind: input, shape index: {}]
  %s9 = inlined_call_operand.hbm [shape: f32[1,512], index: 9, kind: output, shape index: {}]
  %s10 = sld [smem:[#allocation0]]
  $region46: #{critic_forward.1} parent=0
    _
  %s12 = ssub.s32 1, %s10
  %s13 = scalar_select 0, %s12, %s10
  %v14 = vstv %s8
  %15 = vst [vmem:[#allocation2] sm:$0x1] %v14
  $region1: #{critic_forward.1} parent=0
    #allocation3 [shape = 'u8[2048]{0}', space=vmem, size = 0x800, scoped, tag = 'output window, operand 0, single buffered']
    #allocation4 [shape = 's32[1]{0}', space=sflag, size = 0x4, scoped, tag = 'scoped memory for critic_forward.1']
    %16 = vsyncpa [#allocation4], 0
    // Predicated region
    $region2: #{critic_forward.1} parent=1 // pred_check
      _
    $region3: #{critic_forward.1} parent=1 // pred_check_branch
      %18 = sbr.rel (0) target = $region5
    $region4: #{critic_forward.1} parent=1 // pred_region
      _
    $region5: #{critic_forward.1} parent=1 // pred_fallthru
      _
    // Predicated region
    $region6: #{critic_forward.1} parent=1 // pred_check
      _
    $region7: #{critic_forward.1} parent=1 // pred_check_branch
      %20 = sbr.rel (0) target = $region9
    $region8: #{critic_forward.1} parent=1 // pred_region
      _
    $region9: #{critic_forward.1} parent=1 // pred_fallthru
      _
    // Predicated region
    $region10: #{critic_forward.1} parent=1 // pred_check
      _
    $region11: #{critic_forward.1} parent=1 // pred_check_branch
      %22 = sbr.rel (0) target = $region13
    $region12: #{critic_forward.1} parent=1 // pred_region
      _
    $region13: #{critic_forward.1} parent=1 // pred_fallthru
      _
    // Predicated region
    $region14: #{critic_forward.1} parent=1 // pred_check
      _
    $region15: #{critic_forward.1} parent=1 // pred_check_branch
      %24 = sbr.rel (0) target = $region17
    $region16: #{critic_forward.1} parent=1 // pred_region
      _
    $region17: #{critic_forward.1} parent=1 // pred_fallthru
      _
    // Predicated region
    $region18: #{critic_forward.1} parent=1 // pred_check
      _
    $region19: #{critic_forward.1} parent=1 // pred_check_branch
      %26 = sbr.rel (0) target = $region21
    $region20: #{critic_forward.1} parent=1 // pred_region
      _
    $region21: #{critic_forward.1} parent=1 // pred_fallthru
      _
    // Predicated region
    $region22: #{critic_forward.1} parent=1 // pred_check
      _
    $region23: #{critic_forward.1} parent=1 // pred_check_branch
      %28 = sbr.rel (0) target = $region25
    $region24: #{critic_forward.1} parent=1 // pred_region
      _
    $region25: #{critic_forward.1} parent=1 // pred_fallthru
      _
    // Predicated region
    $region26: #{critic_forward.1} parent=1 // pred_check
      _
    $region27: #{critic_forward.1} parent=1 // pred_check_branch
      %30 = sbr.rel (0) target = $region29
    $region28: #{critic_forward.1} parent=1 // pred_region
      _
    $region29: #{critic_forward.1} parent=1 // pred_fallthru
      _
    // Predicated region
    $region30: #{critic_forward.1} parent=1 // pred_check
      _
    $region31: #{critic_forward.1} parent=1 // pred_check_branch
      %32 = sbr.rel (0) target = $region33
    $region32: #{critic_forward.1} parent=1 // pred_region
      _
    $region33: #{critic_forward.1} parent=1 // pred_fallthru
      _
    // Predicated region
    $region34: #{critic_forward.1} parent=1 // pred_check
      _
    $region35: #{critic_forward.1} parent=1 // pred_check_branch
      %34 = sbr.rel (0) target = $region37
    $region36: #{critic_forward.1} parent=1 // pred_region
      _
    $region37: #{critic_forward.1} parent=1 // pred_fallthru
      _
    %v35 = vld [vmem:[%s0] sm:$0xff]
    %v36 = vld [vmem:[%s0 + $0x8] sm:$0xff]
    %v37 = vld [vmem:[%s0 + $0x10] sm:$0xff]
    %v38 = vld [vmem:[%s0 + $0x18] sm:$0xff]
    %v39 = vld [vmem:[%s0 + $0x20] sm:$0xff]
    %v40 = vld [vmem:[%s0 + $0x28] sm:$0xff]
    %v41 = vld [vmem:[%s0 + $0x30] sm:$0xff]
    %v42 = vld [vmem:[%s0 + $0x38] sm:$0xff]
    %v43 = vld [vmem:[%s0 + $0x40] sm:$0xff]
    %v44 = vld [vmem:[%s0 + $0x48] sm:$0xff]
    %v45 = vld [vmem:[%s0 + $0x50] sm:$0xff]
    %v46 = vld [vmem:[%s0 + $0x58] sm:$0xff]
    %v47 = vld [vmem:[%s0 + $0x60] sm:$0xff]
    %v48 = vld [vmem:[%s0 + $0x68] sm:$0xff]
    %v49 = vld [vmem:[%s0 + $0x70] sm:$0xff]
    %v50 = vld [vmem:[%s0 + $0x78] sm:$0xff]
    %v51 = vld [vmem:[%s0 + $0x80] sm:$0xff]
    %v52 = vld [vmem:[%s0 + $0x88] sm:$0xff]
    %v53 = vld [vmem:[%s0 + $0x90] sm:$0xff]
    %v54 = vld [vmem:[%s0 + $0x98] sm:$0xff]
    %v55 = vld [vmem:[%s0 + $0xa0] sm:$0xff]
    %v56 = vld [vmem:[%s0 + $0xa8] sm:$0xff]
    %v57 = vld [vmem:[%s0 + $0xb0] sm:$0xff]
    %v58 = vld [vmem:[%s0 + $0xb8] sm:$0xff]
    %v59 = vld [vmem:[%s0 + $0xc0] sm:$0xff]
    %v60 = vld [vmem:[%s0 + $0xc8] sm:$0xff]
    %v61 = vld [vmem:[%s0 + $0xd0] sm:$0xff]
    %v62 = vld [vmem:[%s0 + $0xd8] sm:$0xff]
    %v63 = vld [vmem:[%s0 + $0xe0] sm:$0xff]
    %v64 = vld [vmem:[%s0 + $0xe8] sm:$0xff]
    %v65 = vld [vmem:[%s0 + $0xf0] sm:$0xff]
    %v66 = vld [vmem:[%s0 + $0xf8] sm:$0xff]
    %v67 = vld [vmem:[%s0 + $0x100] sm:$0xff]
    %v68 = vld [vmem:[%s0 + $0x108] sm:$0xff]
    %v69 = vld [vmem:[%s0 + $0x110] sm:$0xff]
    %v70 = vld [vmem:[%s0 + $0x118] sm:$0xff]
    %v71 = vld [vmem:[%s0 + $0x120] sm:$0xff]
    %v72 = vld [vmem:[%s0 + $0x128] sm:$0xff]
    %v73 = vld [vmem:[%s0 + $0x130] sm:$0xff]
    %v74 = vld [vmem:[%s0 + $0x138] sm:$0xff]
    %v75 = vld [vmem:[%s0 + $0x140] sm:$0xff]
    %v76 = vld [vmem:[%s0 + $0x148] sm:$0xff]
    %v77 = vld [vmem:[%s0 + $0x150] sm:$0xff]
    %v78 = vld [vmem:[%s0 + $0x158] sm:$0xff]
    %v79 = vld [vmem:[%s0 + $0x160] sm:$0xff]
    %v80 = vld [vmem:[%s0 + $0x168] sm:$0xff]
    %v81 = vld [vmem:[%s0 + $0x170] sm:$0xff]
    %v82 = vld [vmem:[%s0 + $0x178] sm:$0xff]
    %v83 = vld [vmem:[%s0 + $0x180] sm:$0xff]
    %v84 = vld [vmem:[%s0 + $0x188] sm:$0xff]
    %v85 = vld [vmem:[%s0 + $0x190] sm:$0xff]
    %v86 = vld [vmem:[%s0 + $0x198] sm:$0xff]
    %v87 = vld [vmem:[%s0 + $0x1a0] sm:$0xff]
    %v88 = vld [vmem:[%s0 + $0x1a8] sm:$0xff]
    %v89 = vld [vmem:[%s0 + $0x1b0] sm:$0xff]
    %v90 = vld [vmem:[%s0 + $0x1b8] sm:$0xff]
    %v91 = vld [vmem:[%s0 + $0x1c0] sm:$0xff]
    %v92 = vld [vmem:[%s0 + $0x1c8] sm:$0xff]
    %v93 = vld [vmem:[%s0 + $0x1d0] sm:$0xff]
    %v94 = vld [vmem:[%s0 + $0x1d8] sm:$0xff]
    %v95 = vld [vmem:[%s0 + $0x1e0] sm:$0xff]
    %v96 = vld [vmem:[%s0 + $0x1e8] sm:$0xff]
    %v97 = vld [vmem:[%s0 + $0x1f0] sm:$0xff]
    %v98 = vld [vmem:[%s0 + $0x1f8] sm:$0xff]
    %v99 = vld [vmem:[%s1] sm:$0xff]
    %v100 = vld [vmem:[%s1 + $0x8] sm:$0xff]
    %v101 = vld [vmem:[%s1 + $0x10] sm:$0xff]
    %v102 = vld [vmem:[%s1 + $0x18] sm:$0xff]
    %v103 = vld [vmem:[%s1 + $0x20] sm:$0xff]
    %v104 = vld [vmem:[%s1 + $0x28] sm:$0xff]
    %v105 = vld [vmem:[%s1 + $0x30] sm:$0xff]
    %v106 = vld [vmem:[%s1 + $0x38] sm:$0xff]
    %v107 = vld [vmem:[%s2] sm:$0xff]
    %v108 = vld [vmem:[%s2 + $0x8] sm:$0xff]
    %v109 = vld [vmem:[%s2 + $0x10] sm:$0xff]
    %v110 = vld [vmem:[%s2 + $0x18] sm:$0xff]
    %v111 = vld [vmem:[%s2 + $0x20] sm:$0xff]
    %v112 = vld [vmem:[%s2 + $0x28] sm:$0xff]
    %v113 = vld [vmem:[%s2 + $0x30] sm:$0xff]
    %v114 = vld [vmem:[%s2 + $0x38] sm:$0xff]
    %116 = vset.pattern.permute.xlu0 0
    %117 = vperm.xlu0 %116, %v107
    %v118 = vpop.permute.xlu0 %117
    %121 = vset.pattern.permute.xlu0 0
    %122 = vperm.xlu0 %121, %v108
    %v123 = vpop.permute.xlu0 %122
    %126 = vset.pattern.permute.xlu0 0
    %127 = vperm.xlu0 %126, %v109
    %v128 = vpop.permute.xlu0 %127
    %131 = vset.pattern.permute.xlu0 0
    %132 = vperm.xlu0 %131, %v110
    %v133 = vpop.permute.xlu0 %132
    %136 = vset.pattern.permute.xlu0 0
    %137 = vperm.xlu0 %136, %v111
    %v138 = vpop.permute.xlu0 %137
    %141 = vset.pattern.permute.xlu0 0
    %142 = vperm.xlu0 %141, %v112
    %v143 = vpop.permute.xlu0 %142
    %146 = vset.pattern.permute.xlu0 0
    %147 = vperm.xlu0 %146, %v113
    %v148 = vpop.permute.xlu0 %147
    %151 = vset.pattern.permute.xlu0 0
    %152 = vperm.xlu0 %151, %v114
    %v153 = vpop.permute.xlu0 %152
    %vm155 = vcmask 523264
    %v157 = vsel %vm155, %v99, 0
    %v160 = vsel %vm155, %v100, 0
    %v163 = vsel %vm155, %v101, 0
    %v166 = vsel %vm155, %v102, 0
    %v169 = vsel %vm155, %v103, 0
    %v172 = vsel %vm155, %v104, 0
    %v175 = vsel %vm155, %v105, 0
    %v178 = vsel %vm155, %v106, 0
    %v181 = vsel %vm155, %v35, 0
    %v184 = vsel %vm155, %v36, 0
    %v187 = vsel %vm155, %v37, 0
    %v190 = vsel %vm155, %v38, 0
    %v193 = vsel %vm155, %v39, 0
    %v196 = vsel %vm155, %v40, 0
    %v199 = vsel %vm155, %v41, 0
    %v202 = vsel %vm155, %v42, 0
    %v205 = vsel %vm155, %v43, 0
    %v208 = vsel %vm155, %v44, 0
    %v211 = vsel %vm155, %v45, 0
    %v214 = vsel %vm155, %v46, 0
    %v217 = vsel %vm155, %v47, 0
    %v220 = vsel %vm155, %v48, 0
    %v223 = vsel %vm155, %v49, 0
    %v226 = vsel %vm155, %v50, 0
    %v229 = vsel %vm155, %v51, 0
    %v232 = vsel %vm155, %v52, 0
    %v235 = vsel %vm155, %v53, 0
    %v238 = vsel %vm155, %v54, 0
    %v241 = vsel %vm155, %v55, 0
    %v244 = vsel %vm155, %v56, 0
    %v247 = vsel %vm155, %v57, 0
    %v250 = vsel %vm155, %v58, 0
    %v253 = vsel %vm155, %v59, 0
    %v256 = vsel %vm155, %v60, 0
    %v259 = vsel %vm155, %v61, 0
    %v262 = vsel %vm155, %v62, 0
    %v265 = vsel %vm155, %v63, 0
    %v268 = vsel %vm155, %v64, 0
    %v271 = vsel %vm155, %v65, 0
    %v274 = vsel %vm155, %v66, 0
    %v277 = vsel %vm155, %v67, 0
    %v280 = vsel %vm155, %v68, 0
    %v283 = vsel %vm155, %v69, 0
    %v286 = vsel %vm155, %v70, 0
    %v289 = vsel %vm155, %v71, 0
    %v292 = vsel %vm155, %v72, 0
    %v295 = vsel %vm155, %v73, 0
    %v298 = vsel %vm155, %v74, 0
    %v301 = vsel %vm155, %v75, 0
    %v304 = vsel %vm155, %v76, 0
    %v307 = vsel %vm155, %v77, 0
    %v310 = vsel %vm155, %v78, 0
    %v313 = vsel %vm155, %v79, 0
    %v316 = vsel %vm155, %v80, 0
    %v319 = vsel %vm155, %v81, 0
    %v322 = vsel %vm155, %v82, 0
    %v325 = vsel %vm155, %v83, 0
    %v328 = vsel %vm155, %v84, 0
    %v331 = vsel %vm155, %v85, 0
    %v334 = vsel %vm155, %v86, 0
    %v337 = vsel %vm155, %v87, 0
    %v340 = vsel %vm155, %v88, 0
    %v343 = vsel %vm155, %v89, 0
    %v346 = vsel %vm155, %v90, 0
    %v349 = vsel %vm155, %v91, 0
    %v352 = vsel %vm155, %v92, 0
    %v355 = vsel %vm155, %v93, 0
    %v358 = vsel %vm155, %v94, 0
    %v361 = vsel %vm155, %v95, 0
    %v364 = vsel %vm155, %v96, 0
    %v367 = vsel %vm155, %v97, 0
    %v370 = vsel %vm155, %v98, 0
    %372 = vmatprep.subr.mxu0 0.0
    %373 = vmatpush1.xpose.msra.mxu0 %v226
    %374 = vmatprep.subr.mxu0 0.0
    %375 = vmatpush1.xpose.msra.mxu0 %v223
    %376 = vmatprep.subr.mxu0 0.0
    %377 = vmatpush1.xpose.msra.mxu0 %v220
    %378 = vmatprep.subr.mxu0 0.0
    %379 = vmatpush1.xpose.msra.mxu0 %v217
    %380 = vmatprep.subr.mxu0 0.0
    %381 = vmatpush1.xpose.msra.mxu0 %v214
    %382 = vmatprep.subr.mxu0 0.0
    %383 = vmatpush1.xpose.msra.mxu0 %v211
    %384 = vmatprep.subr.mxu0 0.0
    %385 = vmatpush1.xpose.msra.mxu0 %v208
    %386 = vmatprep.subr.mxu0 0.0
    %387 = vmatpush1.xpose.msra.mxu0 %v205
    %388 = vmatprep.subr.mxu0 0.0
    %389 = vmatpush1.xpose.msra.mxu0 %v202
    %390 = vmatprep.subr.mxu0 0.0
    %391 = vmatpush1.xpose.msra.mxu0 %v199
    %392 = vmatprep.subr.mxu0 0.0
    %393 = vmatpush1.xpose.msra.mxu0 %v196
    %394 = vmatprep.subr.mxu0 0.0
    %395 = vmatpush1.xpose.msra.mxu0 %v193
    %396 = vmatprep.subr.mxu0 0.0
    %397 = vmatpush1.xpose.msra.mxu0 %v190
    %398 = vmatprep.subr.mxu0 0.0
    %399 = vmatpush1.xpose.msra.mxu0 %v187
    %400 = vmatprep.subr.mxu0 0.0
    %401 = vmatpush1.xpose.msra.mxu0 %v184
    %402 = vmatprep.subr.mxu0 0.0
    %403 = vmatpush1.xpose.msra.mxu0 %v181
    %404 = vmatprep.subr.mxu0 0.0
    %405 = vmatpush2.xpose.msra.mxu0 %v274
    %406 = vmatprep.subr.mxu0 0.0
    %407 = vmatpush2.xpose.msra.mxu0 %v271
    %408 = vmatprep.subr.mxu0 0.0
    %409 = vmatpush2.xpose.msra.mxu0 %v268
    %410 = vmatprep.subr.mxu0 0.0
    %411 = vmatpush2.xpose.msra.mxu0 %v265
    %412 = vmatprep.subr.mxu0 0.0
    %413 = vmatpush2.xpose.msra.mxu0 %v262
    %414 = vmatprep.subr.mxu0 0.0
    %415 = vmatpush2.xpose.msra.mxu0 %v259
    %416 = vmatprep.subr.mxu0 0.0
    %417 = vmatpush2.xpose.msra.mxu0 %v256
    %418 = vmatprep.subr.mxu0 0.0
    %419 = vmatpush2.xpose.msra.mxu0 %v253
    %420 = vmatprep.subr.mxu0 0.0
    %421 = vmatpush2.xpose.msra.mxu0 %v250
    %422 = vmatprep.subr.mxu0 0.0
    %423 = vmatpush2.xpose.msra.mxu0 %v247
    %424 = vmatprep.subr.mxu0 0.0
    %425 = vmatpush2.xpose.msra.mxu0 %v244
    %426 = vmatprep.subr.mxu0 0.0
    %427 = vmatpush2.xpose.msra.mxu0 %v241
    %428 = vmatprep.subr.mxu0 0.0
    %429 = vmatpush2.xpose.msra.mxu0 %v238
    %430 = vmatprep.subr.mxu0 0.0
    %431 = vmatpush2.xpose.msra.mxu0 %v235
    %432 = vmatprep.subr.mxu0 0.0
    %433 = vmatpush2.xpose.msra.mxu0 %v232
    %434 = vmatprep.subr.mxu0 0.0
    %435 = vmatpush2.xpose.msra.mxu0 %v229
    %436 = vmatprep.mubr.f32.mxu0 0.0
    %437 = vmatmul.mubr.f32.gmra.mxu0 %v157
    %v438 = vpop.f32.mrf.mxu0
    %v439 = vadd.f32 %v118, %v438
    %v440 = vpop.f32.mrf.mxu0
    %v441 = vadd.f32 %v118, %v440
    %442 = vmatprep.mubr.f32.mxu0 0.0
    %443 = vmatmul.mubr.f32.gmra.mxu0 %v160
    %v444 = vpop.f32.mrf.mxu0
    %v445 = vadd.f32 %v123, %v444
    %v446 = vpop.f32.mrf.mxu0
    %v447 = vadd.f32 %v123, %v446
    %448 = vmatprep.mubr.f32.mxu0 0.0
    %449 = vmatmul.mubr.f32.gmra.mxu0 %v163
    %v450 = vpop.f32.mrf.mxu0
    %v451 = vadd.f32 %v128, %v450
    %v452 = vpop.f32.mrf.mxu0
    %v453 = vadd.f32 %v128, %v452
    %454 = vmatprep.mubr.f32.mxu0 0.0
    %455 = vmatmul.mubr.f32.gmra.mxu0 %v166
    %v456 = vpop.f32.mrf.mxu0
    %v457 = vadd.f32 %v133, %v456
    %v458 = vpop.f32.mrf.mxu0
    %v459 = vadd.f32 %v133, %v458
    %460 = vmatprep.mubr.f32.mxu0 0.0
    %461 = vmatmul.mubr.f32.gmra.mxu0 %v169
    %v462 = vpop.f32.mrf.mxu0
    %v463 = vadd.f32 %v138, %v462
    %v464 = vpop.f32.mrf.mxu0
    %v465 = vadd.f32 %v138, %v464
    %466 = vmatprep.mubr.f32.mxu0 0.0
    %467 = vmatmul.mubr.f32.gmra.mxu0 %v172
    %v468 = vpop.f32.mrf.mxu0
    %v469 = vadd.f32 %v143, %v468
    %v470 = vpop.f32.mrf.mxu0
    %v471 = vadd.f32 %v143, %v470
    %472 = vmatprep.mubr.f32.mxu0 0.0
    %473 = vmatmul.mubr.f32.gmra.mxu0 %v175
    %v474 = vpop.f32.mrf.mxu0
    %v475 = vadd.f32 %v148, %v474
    %v476 = vpop.f32.mrf.mxu0
    %v477 = vadd.f32 %v148, %v476
    %478 = vmatprep.mubr.f32.mxu0 0.0
    %479 = vmatmul.mubr.f32.gmra.mxu0 %v178
    %v480 = vpop.f32.mrf.mxu0
    %v481 = vadd.f32 %v153, %v480
    %v482 = vpop.f32.mrf.mxu0
    %v483 = vadd.f32 %v153, %v482
    %484 = vdwg.mxu0
    %485 = vmatprep.subr.mxu0 0.0
    %486 = vmatpush1.xpose.msra.mxu0 %v322
    %487 = vmatprep.subr.mxu0 0.0
    %488 = vmatpush1.xpose.msra.mxu0 %v319
    %489 = vmatprep.subr.mxu0 0.0
    %490 = vmatpush1.xpose.msra.mxu0 %v316
    %491 = vmatprep.subr.mxu0 0.0
    %492 = vmatpush1.xpose.msra.mxu0 %v313
    %493 = vmatprep.subr.mxu0 0.0
    %494 = vmatpush1.xpose.msra.mxu0 %v310
    %495 = vmatprep.subr.mxu0 0.0
    %496 = vmatpush1.xpose.msra.mxu0 %v307
    %497 = vmatprep.subr.mxu0 0.0
    %498 = vmatpush1.xpose.msra.mxu0 %v304
    %499 = vmatprep.subr.mxu0 0.0
    %500 = vmatpush1.xpose.msra.mxu0 %v301
    %501 = vmatprep.subr.mxu0 0.0
    %502 = vmatpush1.xpose.msra.mxu0 %v298
    %503 = vmatprep.subr.mxu0 0.0
    %504 = vmatpush1.xpose.msra.mxu0 %v295
    %505 = vmatprep.subr.mxu0 0.0
    %506 = vmatpush1.xpose.msra.mxu0 %v292
    %507 = vmatprep.subr.mxu0 0.0
    %508 = vmatpush1.xpose.msra.mxu0 %v289
    %509 = vmatprep.subr.mxu0 0.0
    %510 = vmatpush1.xpose.msra.mxu0 %v286
    %511 = vmatprep.subr.mxu0 0.0
    %512 = vmatpush1.xpose.msra.mxu0 %v283
    %513 = vmatprep.subr.mxu0 0.0
    %514 = vmatpush1.xpose.msra.mxu0 %v280
    %515 = vmatprep.subr.mxu0 0.0
    %516 = vmatpush1.xpose.msra.mxu0 %v277
    %517 = vmatprep.subr.mxu0 0.0
    %518 = vmatpush2.xpose.msra.mxu0 %v370
    %519 = vmatprep.subr.mxu0 0.0
    %520 = vmatpush2.xpose.msra.mxu0 %v367
    %521 = vmatprep.subr.mxu0 0.0
    %522 = vmatpush2.xpose.msra.mxu0 %v364
    %523 = vmatprep.subr.mxu0 0.0
    %524 = vmatpush2.xpose.msra.mxu0 %v361
    %525 = vmatprep.subr.mxu0 0.0
    %526 = vmatpush2.xpose.msra.mxu0 %v358
    %527 = vmatprep.subr.mxu0 0.0
    %528 = vmatpush2.xpose.msra.mxu0 %v355
    %529 = vmatprep.subr.mxu0 0.0
    %530 = vmatpush2.xpose.msra.mxu0 %v352
    %531 = vmatprep.subr.mxu0 0.0
    %532 = vmatpush2.xpose.msra.mxu0 %v349
    %533 = vmatprep.subr.mxu0 0.0
    %534 = vmatpush2.xpose.msra.mxu0 %v346
    %535 = vmatprep.subr.mxu0 0.0
    %536 = vmatpush2.xpose.msra.mxu0 %v343
    %537 = vmatprep.subr.mxu0 0.0
    %538 = vmatpush2.xpose.msra.mxu0 %v340
    %539 = vmatprep.subr.mxu0 0.0
    %540 = vmatpush2.xpose.msra.mxu0 %v337
    %541 = vmatprep.subr.mxu0 0.0
    %542 = vmatpush2.xpose.msra.mxu0 %v334
    %543 = vmatprep.subr.mxu0 0.0
    %544 = vmatpush2.xpose.msra.mxu0 %v331
    %545 = vmatprep.subr.mxu0 0.0
    %546 = vmatpush2.xpose.msra.mxu0 %v328
    %547 = vmatprep.subr.mxu0 0.0
    %548 = vmatpush2.xpose.msra.mxu0 %v325
    %549 = vmatprep.mubr.f32.mxu0 0.0
    %550 = vmatmul.mubr.f32.gmra.mxu0 %v157
    %v551 = vpop.f32.mrf.mxu0
    %v552 = vadd.f32 %v118, %v551
    %v553 = vpop.f32.mrf.mxu0
    %v554 = vadd.f32 %v118, %v553
    %555 = vmatprep.mubr.f32.mxu0 0.0
    %556 = vmatmul.mubr.f32.gmra.mxu0 %v160
    %v557 = vpop.f32.mrf.mxu0
    %v558 = vadd.f32 %v123, %v557
    %v559 = vpop.f32.mrf.mxu0
    %v560 = vadd.f32 %v123, %v559
    %561 = vmatprep.mubr.f32.mxu0 0.0
    %562 = vmatmul.mubr.f32.gmra.mxu0 %v163
    %v563 = vpop.f32.mrf.mxu0
    %v564 = vadd.f32 %v128, %v563
    %v565 = vpop.f32.mrf.mxu0
    %v566 = vadd.f32 %v128, %v565
    %567 = vmatprep.mubr.f32.mxu0 0.0
    %568 = vmatmul.mubr.f32.gmra.mxu0 %v166
    %v569 = vpop.f32.mrf.mxu0
    %v570 = vadd.f32 %v133, %v569
    %v571 = vpop.f32.mrf.mxu0
    %v572 = vadd.f32 %v133, %v571
    %573 = vmatprep.mubr.f32.mxu0 0.0
    %574 = vmatmul.mubr.f32.gmra.mxu0 %v169
    %v575 = vpop.f32.mrf.mxu0
    %v576 = vadd.f32 %v138, %v575
    %v577 = vpop.f32.mrf.mxu0
    %v578 = vadd.f32 %v138, %v577
    %579 = vmatprep.mubr.f32.mxu0 0.0
    %580 = vmatmul.mubr.f32.gmra.mxu0 %v172
    %v581 = vpop.f32.mrf.mxu0
    %v582 = vadd.f32 %v143, %v581
    %v583 = vpop.f32.mrf.mxu0
    %v584 = vadd.f32 %v143, %v583
    %585 = vmatprep.mubr.f32.mxu0 0.0
    %586 = vmatmul.mubr.f32.gmra.mxu0 %v175
    %v587 = vpop.f32.mrf.mxu0
    %v588 = vadd.f32 %v148, %v587
    %v589 = vpop.f32.mrf.mxu0
    %v590 = vadd.f32 %v148, %v589
    %591 = vmatprep.mubr.f32.mxu0 0.0
    %592 = vmatmul.mubr.f32.gmra.mxu0 %v178
    %v593 = vpop.f32.mrf.mxu0
    %v594 = vadd.f32 %v153, %v593
    %v595 = vpop.f32.mrf.mxu0
    %v596 = vadd.f32 %v153, %v595
    %597 = vdwg.mxu0
    %v598 = vmax.f32 %v439, %v463
    %v599 = vmax.f32 %v441, %v465
    %v600 = vmax.f32 %v552, %v576
    %v601 = vmax.f32 %v554, %v578
    %v602 = vmax.f32 %v445, %v469
    %v603 = vmax.f32 %v447, %v471
    %v604 = vmax.f32 %v558, %v582
    %v605 = vmax.f32 %v560, %v584
    %v606 = vmax.f32 %v451, %v475
    %v607 = vmax.f32 %v453, %v477
    %v608 = vmax.f32 %v564, %v588
    %v609 = vmax.f32 %v566, %v590
    %v610 = vmax.f32 %v457, %v481
    %v611 = vmax.f32 %v459, %v483
    %v612 = vmax.f32 %v570, %v594
    %v613 = vmax.f32 %v572, %v596
    %v614 = vld [vmem:[%s3] sm:$0xff]
    %v615 = vld [vmem:[%s3 + $0x8] sm:$0xff]
    %v616 = vld [vmem:[%s3 + $0x10] sm:$0xff]
    %v617 = vld [vmem:[%s3 + $0x18] sm:$0xff]
    %v618 = vld [vmem:[%s4] sm:$0xff]
    %v619 = vld [vmem:[%s4 + $0x8] sm:$0xff]
    %v620 = vld [vmem:[%s4 + $0x10] sm:$0xff]
    %v621 = vld [vmem:[%s4 + $0x18] sm:$0xff]
    %623 = vset.pattern.permute.xlu0 0
    %624 = vperm.xlu0 %623, %v618
    %v625 = vpop.permute.xlu0 %624
    %628 = vset.pattern.permute.xlu0 0
    %629 = vperm.xlu0 %628, %v619
    %v630 = vpop.permute.xlu0 %629
    %633 = vset.pattern.permute.xlu0 0
    %634 = vperm.xlu0 %633, %v620
    %v635 = vpop.permute.xlu0 %634
    %638 = vset.pattern.permute.xlu0 0
    %639 = vperm.xlu0 %638, %v621
    %v640 = vpop.permute.xlu0 %639
    %vm642 = vcmask 261120
    %v644 = vsel %vm642, %v614, 0
    %v647 = vsel %vm642, %v615, 0
    %v650 = vsel %vm642, %v616, 0
    %v653 = vsel %vm642, %v617, 0
    %655 = vmatprep.subr.mxu0 0.0
    %656 = vmatpush1.msra.mxu0 0.0
    %657 = vmatprep.subr.mxu0 0.0
    %658 = vmatpush1.msra.mxu0 0.0
    %659 = vmatprep.subr.mxu0 0.0
    %660 = vmatpush1.msra.mxu0 0.0
    %661 = vmatprep.subr.mxu0 0.0
    %662 = vmatpush1.msra.mxu0 0.0
    %663 = vmatprep.subr.mxu0 0.0
    %664 = vmatpush1.msra.mxu0 0.0
    %665 = vmatprep.subr.mxu0 0.0
    %666 = vmatpush1.msra.mxu0 0.0
    %667 = vmatprep.subr.mxu0 0.0
    %668 = vmatpush1.msra.mxu0 0.0
    %669 = vmatprep.subr.mxu0 0.0
    %670 = vmatpush1.msra.mxu0 0.0
    %671 = vmatprep.subr.mxu0 0.0
    %672 = vmatpush1.msra.mxu0 0.0
    %673 = vmatprep.subr.mxu0 0.0
    %674 = vmatpush1.msra.mxu0 0.0
    %675 = vmatprep.subr.mxu0 0.0
    %676 = vmatpush1.msra.mxu0 0.0
    %677 = vmatprep.subr.mxu0 0.0
    %678 = vmatpush1.msra.mxu0 0.0
    %679 = vmatprep.subr.mxu0 %v611
    %680 = vmatpush1.msra.mxu0 %v610
    %681 = vmatprep.subr.mxu0 %v607
    %682 = vmatpush1.msra.mxu0 %v606
    %683 = vmatprep.subr.mxu0 %v603
    %684 = vmatpush1.msra.mxu0 %v602
    %685 = vmatprep.subr.mxu0 %v599
    %686 = vmatpush1.msra.mxu0 %v598
    %687 = vmatprep.subr.mxu0 0.0
    %688 = vmatpush2.msra.mxu0 0.0
    %689 = vmatprep.subr.mxu0 0.0
    %690 = vmatpush2.msra.mxu0 0.0
    %691 = vmatprep.subr.mxu0 0.0
    %692 = vmatpush2.msra.mxu0 0.0
    %693 = vmatprep.subr.mxu0 0.0
    %694 = vmatpush2.msra.mxu0 0.0
    %695 = vmatprep.subr.mxu0 0.0
    %696 = vmatpush2.msra.mxu0 0.0
    %697 = vmatprep.subr.mxu0 0.0
    %698 = vmatpush2.msra.mxu0 0.0
    %699 = vmatprep.subr.mxu0 0.0
    %700 = vmatpush2.msra.mxu0 0.0
    %701 = vmatprep.subr.mxu0 0.0
    %702 = vmatpush2.msra.mxu0 0.0
    %703 = vmatprep.subr.mxu0 0.0
    %704 = vmatpush2.msra.mxu0 0.0
    %705 = vmatprep.subr.mxu0 0.0
    %706 = vmatpush2.msra.mxu0 0.0
    %707 = vmatprep.subr.mxu0 0.0
    %708 = vmatpush2.msra.mxu0 0.0
    %709 = vmatprep.subr.mxu0 0.0
    %710 = vmatpush2.msra.mxu0 0.0
    %711 = vmatprep.subr.mxu0 0.0
    %712 = vmatpush2.msra.mxu0 0.0
    %713 = vmatprep.subr.mxu0 0.0
    %714 = vmatpush2.msra.mxu0 0.0
    %715 = vmatprep.subr.mxu0 0.0
    %716 = vmatpush2.msra.mxu0 0.0
    %717 = vmatprep.subr.mxu0 0.0
    %718 = vmatpush2.msra.mxu0 0.0
    %719 = vmatprep.mubr.f32.mxu0 0.0
    %720 = vmatmul.mubr.f32.gmra.mxu0 %v644
    %v721 = vpop.f32.mrf.mxu0
    %v722 = vadd.f32 %v625, %v721
    %v723 = vpop.f32.mrf.mxu0
    %v724 = vadd.f32 %v625, %v723
    %725 = vmatprep.mubr.f32.mxu0 0.0
    %726 = vmatmul.mubr.f32.gmra.mxu0 %v647
    %v727 = vpop.f32.mrf.mxu0
    %v728 = vadd.f32 %v630, %v727
    %v729 = vpop.f32.mrf.mxu0
    %v730 = vadd.f32 %v630, %v729
    %731 = vmatprep.mubr.f32.mxu0 0.0
    %732 = vmatmul.mubr.f32.gmra.mxu0 %v650
    %v733 = vpop.f32.mrf.mxu0
    %v734 = vadd.f32 %v635, %v733
    %v735 = vpop.f32.mrf.mxu0
    %v736 = vadd.f32 %v635, %v735
    %737 = vmatprep.mubr.f32.mxu0 0.0
    %738 = vmatmul.mubr.f32.gmra.mxu0 %v653
    %v739 = vpop.f32.mrf.mxu0
    %v740 = vadd.f32 %v640, %v739
    %v741 = vpop.f32.mrf.mxu0
    %v742 = vadd.f32 %v640, %v741
    %743 = vdwg.mxu0
    %744 = vmatprep.subr.mxu0 0.0
    %745 = vmatpush1.msra.mxu0 0.0
    %746 = vmatprep.subr.mxu0 0.0
    %747 = vmatpush1.msra.mxu0 0.0
    %748 = vmatprep.subr.mxu0 0.0
    %749 = vmatpush1.msra.mxu0 0.0
    %750 = vmatprep.subr.mxu0 0.0
    %751 = vmatpush1.msra.mxu0 0.0
    %752 = vmatprep.subr.mxu0 0.0
    %753 = vmatpush1.msra.mxu0 0.0
    %754 = vmatprep.subr.mxu0 0.0
    %755 = vmatpush1.msra.mxu0 0.0
    %756 = vmatprep.subr.mxu0 0.0
    %757 = vmatpush1.msra.mxu0 0.0
    %758 = vmatprep.subr.mxu0 0.0
    %759 = vmatpush1.msra.mxu0 0.0
    %760 = vmatprep.subr.mxu0 0.0
    %761 = vmatpush1.msra.mxu0 0.0
    %762 = vmatprep.subr.mxu0 0.0
    %763 = vmatpush1.msra.mxu0 0.0
    %764 = vmatprep.subr.mxu0 0.0
    %765 = vmatpush1.msra.mxu0 0.0
    %766 = vmatprep.subr.mxu0 0.0
    %767 = vmatpush1.msra.mxu0 0.0
    %768 = vmatprep.subr.mxu0 %v613
    %769 = vmatpush1.msra.mxu0 %v612
    %770 = vmatprep.subr.mxu0 %v609
    %771 = vmatpush1.msra.mxu0 %v608
    %772 = vmatprep.subr.mxu0 %v605
    %773 = vmatpush1.msra.mxu0 %v604
    %774 = vmatprep.subr.mxu0 %v601
    %775 = vmatpush1.msra.mxu0 %v600
    %776 = vmatprep.subr.mxu0 0.0
    %777 = vmatpush2.msra.mxu0 0.0
    %778 = vmatprep.subr.mxu0 0.0
    %779 = vmatpush2.msra.mxu0 0.0
    %780 = vmatprep.subr.mxu0 0.0
    %781 = vmatpush2.msra.mxu0 0.0
    %782 = vmatprep.subr.mxu0 0.0
    %783 = vmatpush2.msra.mxu0 0.0
    %784 = vmatprep.subr.mxu0 0.0
    %785 = vmatpush2.msra.mxu0 0.0
    %786 = vmatprep.subr.mxu0 0.0
    %787 = vmatpush2.msra.mxu0 0.0
    %788 = vmatprep.subr.mxu0 0.0
    %789 = vmatpush2.msra.mxu0 0.0
    %790 = vmatprep.subr.mxu0 0.0
    %791 = vmatpush2.msra.mxu0 0.0
    %792 = vmatprep.subr.mxu0 0.0
    %793 = vmatpush2.msra.mxu0 0.0
    %794 = vmatprep.subr.mxu0 0.0
    %795 = vmatpush2.msra.mxu0 0.0
    %796 = vmatprep.subr.mxu0 0.0
    %797 = vmatpush2.msra.mxu0 0.0
    %798 = vmatprep.subr.mxu0 0.0
    %799 = vmatpush2.msra.mxu0 0.0
    %800 = vmatprep.subr.mxu0 0.0
    %801 = vmatpush2.msra.mxu0 0.0
    %802 = vmatprep.subr.mxu0 0.0
    %803 = vmatpush2.msra.mxu0 0.0
    %804 = vmatprep.subr.mxu0 0.0
    %805 = vmatpush2.msra.mxu0 0.0
    %806 = vmatprep.subr.mxu0 0.0
    %807 = vmatpush2.msra.mxu0 0.0
    %808 = vmatprep.mubr.f32.mxu0 0.0
    %809 = vmatmul.mubr.f32.gmra.mxu0 %v644
    %v810 = vpop.f32.mrf.mxu0
    %v811 = vadd.f32 %v625, %v810
    %v812 = vpop.f32.mrf.mxu0
    %v813 = vadd.f32 %v625, %v812
    %814 = vmatprep.mubr.f32.mxu0 0.0
    %815 = vmatmul.mubr.f32.gmra.mxu0 %v647
    %v816 = vpop.f32.mrf.mxu0
    %v817 = vadd.f32 %v630, %v816
    %v818 = vpop.f32.mrf.mxu0
    %v819 = vadd.f32 %v630, %v818
    %820 = vmatprep.mubr.f32.mxu0 0.0
    %821 = vmatmul.mubr.f32.gmra.mxu0 %v650
    %v822 = vpop.f32.mrf.mxu0
    %v823 = vadd.f32 %v635, %v822
    %v824 = vpop.f32.mrf.mxu0
    %v825 = vadd.f32 %v635, %v824
    %826 = vmatprep.mubr.f32.mxu0 0.0
    %827 = vmatmul.mubr.f32.gmra.mxu0 %v653
    %v828 = vpop.f32.mrf.mxu0
    %v829 = vadd.f32 %v640, %v828
    %v830 = vpop.f32.mrf.mxu0
    %v831 = vadd.f32 %v640, %v830
    %832 = vdwg.mxu0
    %v833 = vmax.f32 %v722, 0.0
    %v834 = vmax.f32 %v724, 0.0
    %v835 = vmax.f32 %v811, 0.0
    %v836 = vmax.f32 %v813, 0.0
    %v837 = vmax.f32 %v728, 0.0
    %v838 = vmax.f32 %v730, 0.0
    %v839 = vmax.f32 %v817, 0.0
    %v840 = vmax.f32 %v819, 0.0
    %v841 = vmax.f32 %v734, 0.0
    %v842 = vmax.f32 %v736, 0.0
    %v843 = vmax.f32 %v823, 0.0
    %v844 = vmax.f32 %v825, 0.0
    %v845 = vmax.f32 %v740, 0.0
    %v846 = vmax.f32 %v742, 0.0
    %v847 = vmax.f32 %v829, 0.0
    %v848 = vmax.f32 %v831, 0.0
    %v849 = vld [vmem:[%s5] sm:$0xff]
    %v850 = vld [vmem:[%s5 + $0x8] sm:$0xff]
    %v851 = vld [vmem:[%s5 + $0x10] sm:$0xff]
    %v852 = vld [vmem:[%s5 + $0x18] sm:$0xff]
    %v853 = vld [vmem:[%s6] sm:$0xff]
    %v854 = vld [vmem:[%s6 + $0x8] sm:$0xff]
    %v855 = vld [vmem:[%s6 + $0x10] sm:$0xff]
    %v856 = vld [vmem:[%s6 + $0x18] sm:$0xff]
    %858 = vset.pattern.permute.xlu0 0
    %859 = vperm.xlu0 %858, %v853
    %v860 = vpop.permute.xlu0 %859
    %863 = vset.pattern.permute.xlu0 0
    %864 = vperm.xlu0 %863, %v854
    %v865 = vpop.permute.xlu0 %864
    %868 = vset.pattern.permute.xlu0 0
    %869 = vperm.xlu0 %868, %v855
    %v870 = vpop.permute.xlu0 %869
    %873 = vset.pattern.permute.xlu0 0
    %874 = vperm.xlu0 %873, %v856
    %v875 = vpop.permute.xlu0 %874
    %v878 = vsel %vm642, %v849, 0
    %v881 = vsel %vm642, %v850, 0
    %v884 = vsel %vm642, %v851, 0
    %v887 = vsel %vm642, %v852, 0
    %889 = vmatprep.subr.mxu0 0.0
    %890 = vmatpush1.msra.mxu0 0.0
    %891 = vmatprep.subr.mxu0 0.0
    %892 = vmatpush1.msra.mxu0 0.0
    %893 = vmatprep.subr.mxu0 0.0
    %894 = vmatpush1.msra.mxu0 0.0
    %895 = vmatprep.subr.mxu0 0.0
    %896 = vmatpush1.msra.mxu0 0.0
    %897 = vmatprep.subr.mxu0 0.0
    %898 = vmatpush1.msra.mxu0 0.0
    %899 = vmatprep.subr.mxu0 0.0
    %900 = vmatpush1.msra.mxu0 0.0
    %901 = vmatprep.subr.mxu0 0.0
    %902 = vmatpush1.msra.mxu0 0.0
    %903 = vmatprep.subr.mxu0 0.0
    %904 = vmatpush1.msra.mxu0 0.0
    %905 = vmatprep.subr.mxu0 0.0
    %906 = vmatpush1.msra.mxu0 0.0
    %907 = vmatprep.subr.mxu0 0.0
    %908 = vmatpush1.msra.mxu0 0.0
    %909 = vmatprep.subr.mxu0 0.0
    %910 = vmatpush1.msra.mxu0 0.0
    %911 = vmatprep.subr.mxu0 0.0
    %912 = vmatpush1.msra.mxu0 0.0
    %913 = vmatprep.subr.mxu0 %v846
    %914 = vmatpush1.msra.mxu0 %v845
    %915 = vmatprep.subr.mxu0 %v842
    %916 = vmatpush1.msra.mxu0 %v841
    %917 = vmatprep.subr.mxu0 %v838
    %918 = vmatpush1.msra.mxu0 %v837
    %919 = vmatprep.subr.mxu0 %v834
    %920 = vmatpush1.msra.mxu0 %v833
    %921 = vmatprep.subr.mxu0 0.0
    %922 = vmatpush2.msra.mxu0 0.0
    %923 = vmatprep.subr.mxu0 0.0
    %924 = vmatpush2.msra.mxu0 0.0
    %925 = vmatprep.subr.mxu0 0.0
    %926 = vmatpush2.msra.mxu0 0.0
    %927 = vmatprep.subr.mxu0 0.0
    %928 = vmatpush2.msra.mxu0 0.0
    %929 = vmatprep.subr.mxu0 0.0
    %930 = vmatpush2.msra.mxu0 0.0
    %931 = vmatprep.subr.mxu0 0.0
    %932 = vmatpush2.msra.mxu0 0.0
    %933 = vmatprep.subr.mxu0 0.0
    %934 = vmatpush2.msra.mxu0 0.0
    %935 = vmatprep.subr.mxu0 0.0
    %936 = vmatpush2.msra.mxu0 0.0
    %937 = vmatprep.subr.mxu0 0.0
    %938 = vmatpush2.msra.mxu0 0.0
    %939 = vmatprep.subr.mxu0 0.0
    %940 = vmatpush2.msra.mxu0 0.0
    %941 = vmatprep.subr.mxu0 0.0
    %942 = vmatpush2.msra.mxu0 0.0
    %943 = vmatprep.subr.mxu0 0.0
    %944 = vmatpush2.msra.mxu0 0.0
    %945 = vmatprep.subr.mxu0 0.0
    %946 = vmatpush2.msra.mxu0 0.0
    %947 = vmatprep.subr.mxu0 0.0
    %948 = vmatpush2.msra.mxu0 0.0
    %949 = vmatprep.subr.mxu0 0.0
    %950 = vmatpush2.msra.mxu0 0.0
    %951 = vmatprep.subr.mxu0 0.0
    %952 = vmatpush2.msra.mxu0 0.0
    %953 = vmatprep.mubr.f32.mxu0 0.0
    %954 = vmatmul.mubr.f32.gmra.mxu0 %v878
    %v955 = vpop.f32.mrf.mxu0
    %v956 = vadd.f32 %v860, %v955
    %v957 = vpop.f32.mrf.mxu0
    %v958 = vadd.f32 %v860, %v957
    %959 = vmatprep.mubr.f32.mxu0 0.0
    %960 = vmatmul.mubr.f32.gmra.mxu0 %v881
    %v961 = vpop.f32.mrf.mxu0
    %v962 = vadd.f32 %v865, %v961
    %v963 = vpop.f32.mrf.mxu0
    %v964 = vadd.f32 %v865, %v963
    %965 = vmatprep.mubr.f32.mxu0 0.0
    %966 = vmatmul.mubr.f32.gmra.mxu0 %v884
    %v967 = vpop.f32.mrf.mxu0
    %v968 = vadd.f32 %v870, %v967
    %v969 = vpop.f32.mrf.mxu0
    %v970 = vadd.f32 %v870, %v969
    %971 = vmatprep.mubr.f32.mxu0 0.0
    %972 = vmatmul.mubr.f32.gmra.mxu0 %v887
    %v973 = vpop.f32.mrf.mxu0
    %v974 = vadd.f32 %v875, %v973
    %v975 = vpop.f32.mrf.mxu0
    %v976 = vadd.f32 %v875, %v975
    %977 = vdwg.mxu0
    %978 = vmatprep.subr.mxu0 0.0
    %979 = vmatpush1.msra.mxu0 0.0
    %980 = vmatprep.subr.mxu0 0.0
    %981 = vmatpush1.msra.mxu0 0.0
    %982 = vmatprep.subr.mxu0 0.0
    %983 = vmatpush1.msra.mxu0 0.0
    %984 = vmatprep.subr.mxu0 0.0
    %985 = vmatpush1.msra.mxu0 0.0
    %986 = vmatprep.subr.mxu0 0.0
    %987 = vmatpush1.msra.mxu0 0.0
    %988 = vmatprep.subr.mxu0 0.0
    %989 = vmatpush1.msra.mxu0 0.0
    %990 = vmatprep.subr.mxu0 0.0
    %991 = vmatpush1.msra.mxu0 0.0
    %992 = vmatprep.subr.mxu0 0.0
    %993 = vmatpush1.msra.mxu0 0.0
    %994 = vmatprep.subr.mxu0 0.0
    %995 = vmatpush1.msra.mxu0 0.0
    %996 = vmatprep.subr.mxu0 0.0
    %997 = vmatpush1.msra.mxu0 0.0
    %998 = vmatprep.subr.mxu0 0.0
    %999 = vmatpush1.msra.mxu0 0.0
    %1000 = vmatprep.subr.mxu0 0.0
    %1001 = vmatpush1.msra.mxu0 0.0
    %1002 = vmatprep.subr.mxu0 %v848
    %1003 = vmatpush1.msra.mxu0 %v847
    %1004 = vmatprep.subr.mxu0 %v844
    %1005 = vmatpush1.msra.mxu0 %v843
    %1006 = vmatprep.subr.mxu0 %v840
    %1007 = vmatpush1.msra.mxu0 %v839
    %1008 = vmatprep.subr.mxu0 %v836
    %1009 = vmatpush1.msra.mxu0 %v835
    %1010 = vmatprep.subr.mxu0 0.0
    %1011 = vmatpush2.msra.mxu0 0.0
    %1012 = vmatprep.subr.mxu0 0.0
    %1013 = vmatpush2.msra.mxu0 0.0
    %1014 = vmatprep.subr.mxu0 0.0
    %1015 = vmatpush2.msra.mxu0 0.0
    %1016 = vmatprep.subr.mxu0 0.0
    %1017 = vmatpush2.msra.mxu0 0.0
    %1018 = vmatprep.subr.mxu0 0.0
    %1019 = vmatpush2.msra.mxu0 0.0
    %1020 = vmatprep.subr.mxu0 0.0
    %1021 = vmatpush2.msra.mxu0 0.0
    %1022 = vmatprep.subr.mxu0 0.0
    %1023 = vmatpush2.msra.mxu0 0.0
    %1024 = vmatprep.subr.mxu0 0.0
    %1025 = vmatpush2.msra.mxu0 0.0
    %1026 = vmatprep.subr.mxu0 0.0
    %1027 = vmatpush2.msra.mxu0 0.0
    %1028 = vmatprep.subr.mxu0 0.0
    %1029 = vmatpush2.msra.mxu0 0.0
    %1030 = vmatprep.subr.mxu0 0.0
    %1031 = vmatpush2.msra.mxu0 0.0
    %1032 = vmatprep.subr.mxu0 0.0
    %1033 = vmatpush2.msra.mxu0 0.0
    %1034 = vmatprep.subr.mxu0 0.0
    %1035 = vmatpush2.msra.mxu0 0.0
    %1036 = vmatprep.subr.mxu0 0.0
    %1037 = vmatpush2.msra.mxu0 0.0
    %1038 = vmatprep.subr.mxu0 0.0
    %1039 = vmatpush2.msra.mxu0 0.0
    %1040 = vmatprep.subr.mxu0 0.0
    %1041 = vmatpush2.msra.mxu0 0.0
    %1042 = vmatprep.mubr.f32.mxu0 0.0
    %1043 = vmatmul.mubr.f32.gmra.mxu0 %v878
    %v1044 = vpop.f32.mrf.mxu0
    %v1045 = vadd.f32 %v860, %v1044
    %v1046 = vpop.f32.mrf.mxu0
    %v1047 = vadd.f32 %v860, %v1046
    %1048 = vmatprep.mubr.f32.mxu0 0.0
    %1049 = vmatmul.mubr.f32.gmra.mxu0 %v881
    %v1050 = vpop.f32.mrf.mxu0
    %v1051 = vadd.f32 %v865, %v1050
    %v1052 = vpop.f32.mrf.mxu0
    %v1053 = vadd.f32 %v865, %v1052
    %1054 = vmatprep.mubr.f32.mxu0 0.0
    %1055 = vmatmul.mubr.f32.gmra.mxu0 %v884
    %v1056 = vpop.f32.mrf.mxu0
    %v1057 = vadd.f32 %v870, %v1056
    %v1058 = vpop.f32.mrf.mxu0
    %v1059 = vadd.f32 %v870, %v1058
    %1060 = vmatprep.mubr.f32.mxu0 0.0
    %1061 = vmatmul.mubr.f32.gmra.mxu0 %v887
    %v1062 = vpop.f32.mrf.mxu0
    %v1063 = vadd.f32 %v875, %v1062
    %v1064 = vpop.f32.mrf.mxu0
    %v1065 = vadd.f32 %v875, %v1064
    %1066 = vdwg.mxu0
    %v1067 = vmax.f32 %v956, 0.0
    %v1068 = vmax.f32 %v958, 0.0
    %v1069 = vmax.f32 %v1045, 0.0
    %v1070 = vmax.f32 %v1047, 0.0
    %v1071 = vmax.f32 %v962, 0.0
    %v1072 = vmax.f32 %v964, 0.0
    %v1073 = vmax.f32 %v1051, 0.0
    %v1074 = vmax.f32 %v1053, 0.0
    %v1075 = vmax.f32 %v968, 0.0
    %v1076 = vmax.f32 %v970, 0.0
    %v1077 = vmax.f32 %v1057, 0.0
    %v1078 = vmax.f32 %v1059, 0.0
    %v1079 = vmax.f32 %v974, 0.0
    %v1080 = vmax.f32 %v976, 0.0
    %v1081 = vmax.f32 %v1063, 0.0
    %v1082 = vmax.f32 %v1065, 0.0
    %v1083 = vld [vmem:[%s7] sm:$0x1]
    %v1084 = vld [vmem:[#allocation2] sm:$0x1]
    %1086 = vset.pattern.permute.xlu0 0
    %1087 = vperm.xlu0 %1086, %v1084
    %v1088 = vpop.permute.xlu0 %1087
    %v1090 = vlaneseq
    %v1091 = vshrl.u32 %v1090, 7
    %v1092 = vsub.s32 0, %v1091
    %v1093 = vrot.slane %v1088, %v1092
    %v1095 = vsel %vm642, %v1083, 0
    %1097 = vmatprep.subr.mxu0 0.0
    %1098 = vmatpush1.msra.mxu0 0.0
    %1099 = vmatprep.subr.mxu0 0.0
    %1100 = vmatpush1.msra.mxu0 0.0
    %1101 = vmatprep.subr.mxu0 0.0
    %1102 = vmatpush1.msra.mxu0 0.0
    %1103 = vmatprep.subr.mxu0 0.0
    %1104 = vmatpush1.msra.mxu0 0.0
    %1105 = vmatprep.subr.mxu0 0.0
    %1106 = vmatpush1.msra.mxu0 0.0
    %1107 = vmatprep.subr.mxu0 0.0
    %1108 = vmatpush1.msra.mxu0 0.0
    %1109 = vmatprep.subr.mxu0 0.0
    %1110 = vmatpush1.msra.mxu0 0.0
    %1111 = vmatprep.subr.mxu0 0.0
    %1112 = vmatpush1.msra.mxu0 0.0
    %1113 = vmatprep.subr.mxu0 0.0
    %1114 = vmatpush1.msra.mxu0 0.0
    %1115 = vmatprep.subr.mxu0 0.0
    %1116 = vmatpush1.msra.mxu0 0.0
    %1117 = vmatprep.subr.mxu0 0.0
    %1118 = vmatpush1.msra.mxu0 0.0
    %1119 = vmatprep.subr.mxu0 0.0
    %1120 = vmatpush1.msra.mxu0 0.0
    %1121 = vmatprep.subr.mxu0 %v1080
    %1122 = vmatpush1.msra.mxu0 %v1079
    %1123 = vmatprep.subr.mxu0 %v1076
    %1124 = vmatpush1.msra.mxu0 %v1075
    %1125 = vmatprep.subr.mxu0 %v1072
    %1126 = vmatpush1.msra.mxu0 %v1071
    %1127 = vmatprep.subr.mxu0 %v1068
    %1128 = vmatpush1.msra.mxu0 %v1067
    %1129 = vmatprep.subr.mxu0 0.0
    %1130 = vmatpush2.msra.mxu0 0.0
    %1131 = vmatprep.subr.mxu0 0.0
    %1132 = vmatpush2.msra.mxu0 0.0
    %1133 = vmatprep.subr.mxu0 0.0
    %1134 = vmatpush2.msra.mxu0 0.0
    %1135 = vmatprep.subr.mxu0 0.0
    %1136 = vmatpush2.msra.mxu0 0.0
    %1137 = vmatprep.subr.mxu0 0.0
    %1138 = vmatpush2.msra.mxu0 0.0
    %1139 = vmatprep.subr.mxu0 0.0
    %1140 = vmatpush2.msra.mxu0 0.0
    %1141 = vmatprep.subr.mxu0 0.0
    %1142 = vmatpush2.msra.mxu0 0.0
    %1143 = vmatprep.subr.mxu0 0.0
    %1144 = vmatpush2.msra.mxu0 0.0
    %1145 = vmatprep.subr.mxu0 0.0
    %1146 = vmatpush2.msra.mxu0 0.0
    %1147 = vmatprep.subr.mxu0 0.0
    %1148 = vmatpush2.msra.mxu0 0.0
    %1149 = vmatprep.subr.mxu0 0.0
    %1150 = vmatpush2.msra.mxu0 0.0
    %1151 = vmatprep.subr.mxu0 0.0
    %1152 = vmatpush2.msra.mxu0 0.0
    %1153 = vmatprep.subr.mxu0 0.0
    %1154 = vmatpush2.msra.mxu0 0.0
    %1155 = vmatprep.subr.mxu0 0.0
    %1156 = vmatpush2.msra.mxu0 0.0
    %1157 = vmatprep.subr.mxu0 0.0
    %1158 = vmatpush2.msra.mxu0 0.0
    %1159 = vmatprep.subr.mxu0 0.0
    %1160 = vmatpush2.msra.mxu0 0.0
    %1161 = vmatprep.mubr.f32.mxu0 0.0
    %1162 = vmatmul.mubr.f32.gmra.mxu0 %v1095
    %v1163 = vpop.f32.mrf.mxu0
    %v1164 = vadd.f32 %v1093, %v1163
    %v1165 = vpop.f32.mrf.mxu0
    %v1166 = vadd.f32 %v1093, %v1165
    %1167 = vdwg.mxu0
    %1168 = vmatprep.subr.mxu0 0.0
    %1169 = vmatpush1.msra.mxu0 0.0
    %1170 = vmatprep.subr.mxu0 0.0
    %1171 = vmatpush1.msra.mxu0 0.0
    %1172 = vmatprep.subr.mxu0 0.0
    %1173 = vmatpush1.msra.mxu0 0.0
    %1174 = vmatprep.subr.mxu0 0.0
    %1175 = vmatpush1.msra.mxu0 0.0
    %1176 = vmatprep.subr.mxu0 0.0
    %1177 = vmatpush1.msra.mxu0 0.0
    %1178 = vmatprep.subr.mxu0 0.0
    %1179 = vmatpush1.msra.mxu0 0.0
    %1180 = vmatprep.subr.mxu0 0.0
    %1181 = vmatpush1.msra.mxu0 0.0
    %1182 = vmatprep.subr.mxu0 0.0
    %1183 = vmatpush1.msra.mxu0 0.0
    %1184 = vmatprep.subr.mxu0 0.0
    %1185 = vmatpush1.msra.mxu0 0.0
    %1186 = vmatprep.subr.mxu0 0.0
    %1187 = vmatpush1.msra.mxu0 0.0
    %1188 = vmatprep.subr.mxu0 0.0
    %1189 = vmatpush1.msra.mxu0 0.0
    %1190 = vmatprep.subr.mxu0 0.0
    %1191 = vmatpush1.msra.mxu0 0.0
    %1192 = vmatprep.subr.mxu0 %v1082
    %1193 = vmatpush1.msra.mxu0 %v1081
    %1194 = vmatprep.subr.mxu0 %v1078
    %1195 = vmatpush1.msra.mxu0 %v1077
    %1196 = vmatprep.subr.mxu0 %v1074
    %1197 = vmatpush1.msra.mxu0 %v1073
    %1198 = vmatprep.subr.mxu0 %v1070
    %1199 = vmatpush1.msra.mxu0 %v1069
    %1200 = vmatprep.subr.mxu0 0.0
    %1201 = vmatpush2.msra.mxu0 0.0
    %1202 = vmatprep.subr.mxu0 0.0
    %1203 = vmatpush2.msra.mxu0 0.0
    %1204 = vmatprep.subr.mxu0 0.0
    %1205 = vmatpush2.msra.mxu0 0.0
    %1206 = vmatprep.subr.mxu0 0.0
    %1207 = vmatpush2.msra.mxu0 0.0
    %1208 = vmatprep.subr.mxu0 0.0
    %1209 = vmatpush2.msra.mxu0 0.0
    %1210 = vmatprep.subr.mxu0 0.0
    %1211 = vmatpush2.msra.mxu0 0.0
    %1212 = vmatprep.subr.mxu0 0.0
    %1213 = vmatpush2.msra.mxu0 0.0
    %1214 = vmatprep.subr.mxu0 0.0
    %1215 = vmatpush2.msra.mxu0 0.0
    %1216 = vmatprep.subr.mxu0 0.0
    %1217 = vmatpush2.msra.mxu0 0.0
    %1218 = vmatprep.subr.mxu0 0.0
    %1219 = vmatpush2.msra.mxu0 0.0
    %1220 = vmatprep.subr.mxu0 0.0
    %1221 = vmatpush2.msra.mxu0 0.0
    %1222 = vmatprep.subr.mxu0 0.0
    %1223 = vmatpush2.msra.mxu0 0.0
    %1224 = vmatprep.subr.mxu0 0.0
    %1225 = vmatpush2.msra.mxu0 0.0
    %1226 = vmatprep.subr.mxu0 0.0
    %1227 = vmatpush2.msra.mxu0 0.0
    %1228 = vmatprep.subr.mxu0 0.0
    %1229 = vmatpush2.msra.mxu0 0.0
    %1230 = vmatprep.subr.mxu0 0.0
    %1231 = vmatpush2.msra.mxu0 0.0
    %1232 = vmatprep.mubr.f32.mxu0 0.0
    %1233 = vmatmul.mubr.f32.gmra.mxu0 %v1095
    %v1234 = vpop.f32.mrf.mxu0
    %v1235 = vadd.f32 %v1093, %v1234
    %v1236 = vpop.f32.mrf.mxu0
    %v1237 = vadd.f32 %v1093, %v1236
    %1238 = vdwg.mxu0
    %v1243 = vcombine.low %v1164, %v1166
    %v1244 = vcombine.low %v1235, %v1237
    %v1246 = vunpack.c.l.s4 1966171168
    %v1247 = vunpack.c.0.s8 %v1246
    %v1248 = vlaneseq
    %v1249 = vshrl.u32 %v1248, 7
    %v1250 = vsub.s32 %v1247, %v1249
    %v1251 = vrot.slane %v1243, %v1250
    %v1253 = vunpack.c.l.s4 1966171168
    %v1254 = vunpack.c.0.s8 %v1253
    %v1255 = vlaneseq
    %v1256 = vshrl.u32 %v1255, 7
    %v1257 = vsub.s32 %v1254, %v1256
    %v1258 = vrot.slane %v1244, %v1257
    %v1259 = vcombine.low %v1251, %v1258
    %v1261 = vunpack.c.l.s4 1966171168
    %v1262 = vunpack.c.0.s8 %v1261
    %v1263 = vlaneseq
    %v1264 = vshrl.u32 %v1263, 7
    %v1265 = vsub.s32 %v1262, %v1264
    %v1266 = vrot.slane %v1259, %v1265
    %v1268 = vlaneseq
    %vm1269 = vcmp.ge.s32.totalorder %v1268, 0
    %vm1270 = vcmp.lt.s32.totalorder %v1268, 512
    %vm1271 = vmand %vm1269, %vm1270
    %1272 = vst.msk [vmem:[#allocation3] sm:$0xf] %vm1271, %v1266
    // Predicated region
    $region38: #{critic_forward.1} parent=1 // pred_check
      _
    $region39: #{critic_forward.1} parent=1 // pred_check_branch
      %1274 = sbr.rel (0) target = $region41
    $region40: #{critic_forward.1} parent=1 // pred_region
      %s1276 = ssub.s32 64, 64
      %1277 = vsyncadd [#allocation4], %s1276
      %s1279 = sshll.u32 [#allocation3], 4
      %s1280 = int_to_ptr.vmem [resolvable:$true] %s1279
      %1282 = dma.vmem_to_hbm [thread:$0]  %s1280, 64, %s9, [#allocation4]
    $region41: #{critic_forward.1} parent=1 // pred_fallthru
      _
    // Predicated region
    $region42: #{critic_forward.1} parent=1 // pred_check
      _
    $region43: #{critic_forward.1} parent=1 // pred_check_branch
      %1284 = sbr.rel (0) target = $region45
    $region44: #{critic_forward.1} parent=1 // pred_region
      %1285 = dma.done [#allocation4], 64
    $region45: #{critic_forward.1} parent=1 // pred_fallthru
      _
    %1286 = vsyncpa [#allocation4], 1

</llo_original>
